<compile_context>
chip_gen: v5e
topology: v5e:2x2
jax: 0.10.0
libtpu: 0.0.40
codegen_flags: <defaults>
</compile_context>

<pallas_src>
import functools

import jax
import jax.numpy as jnp
from jax import lax
from jax.experimental import pallas as pl
from jax.experimental.pallas import tpu as pltpu

# Fixed Sobel taps (deterministic "parameters" of EdgeResponse); used by the pure-JAX
# reference.  The kernel uses the equivalent separable form.
_SOBEL_X = ((-1.0, 0.0, 1.0),
            (-2.0, 0.0, 2.0),
            (-1.0, 0.0, 1.0))
_SOBEL_Y = ((-1.0, -2.0, -1.0),
            ( 0.0,  0.0,  0.0),
            ( 1.0,  2.0,  1.0))

_VMEM_SPEC = pl.BlockSpec(memory_space=pltpu.MemorySpace.VMEM)
_ROLL_LIKE_NUMPY = None  # resolved lazily (eagerly, outside any jit trace)


def _roll_probe_kernel(x_ref, o_ref):
    o_ref[...] = pltpu.roll(x_ref[...], 1, 1)


def _resolve_roll_convention():
    """True iff pltpu.roll follows np.roll's direction convention.

    The edge-response boundary masks depend on which side the rotation wraps, so the
    convention is verified once on-device (tiny one-off kernel) instead of assumed.
    """
    global _ROLL_LIKE_NUMPY
    if _ROLL_LIKE_NUMPY is None:
        x = jnp.broadcast_to(jnp.arange(128, dtype=jnp.float32), (8, 128))
        y = pl.pallas_call(
            _roll_probe_kernel,
            out_shape=jax.ShapeDtypeStruct((8, 128), jnp.float32),
            in_specs=[_VMEM_SPEC],
            out_specs=_VMEM_SPEC,
        )(x)
        _ROLL_LIKE_NUMPY = bool(float(y[0, 0]) == 127.0)  # np.roll(x,1,axis=1)[0,0] == 127
    return _ROLL_LIKE_NUMPY


def _edge_loss_kernel(mask_ref, orig_ref, smooth_ref, num_ref, den_ref,
                      *, h, w, n_total, ragged, roll_like_numpy):
    # mask_ref / orig_ref / smooth_ref: (TN, H*W) float32 blocks (images flattened on lanes)
    # num_ref / den_ref:                (1, 1, 1) float32 per-block partial sums
    tn, hw = orig_ref.shape

    # Boundary masks, built once per grid step from the flattened pixel index.
    flat = lax.broadcasted_iota(jnp.int32, (tn, hw), 1)
    col = flat % w
    keep_right = col != (w - 1)        # pixel has an in-bounds (i, j+1) neighbour
    keep_left = col != 0               # pixel has an in-bounds (i, j-1) neighbour
    keep_below = flat < (h - 1) * w    # pixel has an in-bounds (i+1, j) neighbour
    keep_above = flat >= w             # pixel has an in-bounds (i-1, j) neighbour
    zero = jnp.zeros((tn, hw), jnp.float32)

    def nb(x, offset, keep):
        # Value of the flattened neighbour at position p+offset; zero outside the image
        # (both out-of-array wrap and row-crossing are killed by `keep`).  Rolls stay
        # within each sublane row, so rows (= whole images) never mix.
        amount = (-offset) % hw if roll_like_numpy else offset % hw
        return jnp.where(keep, pltpu.roll(x, amount, 1), zero)

    def edge_response(x):
        below = nb(x, w, keep_below)       # x[i+1, j]
        above = nb(x, -w, keep_above)      # x[i-1, j]
        v1 = below + above + (x + x)       # vertical [1, 2, 1]   (for gx)
        v2 = below - above                 # vertical [-1, 0, 1]  (for gy)
        gx = nb(v1, 1, keep_right) - nb(v1, -1, keep_left)               # horiz [-1, 0, 1]
        gy = nb(v2, 1, keep_right) + nb(v2, -1, keep_left) + (v2 + v2)   # horiz [1, 2, 1]
        return gx * gx + gy * gy

    m = mask_ref[...] > 0.0
    if ragged:  # the last grid block may hang past N: drop the padded rows
        valid = lax.broadcasted_iota(jnp.int32, (tn, hw), 0) < (
            n_total - pl.program_id(0) * tn)
        m = jnp.logical_and(m, valid)

    diff = edge_response(orig_ref[...]) - edge_response(smooth_ref[...])
    num = jnp.sum(jnp.where(m, diff * diff, zero))
    den = jnp.sum(m.astype(jnp.float32))

    num_ref[...] = num[None, None, None]
    den_ref[...] = den[None, None, None]


@functools.partial(jax.jit, static_argnames=("roll_like_numpy",))
def _edge_preserving_loss_impl(binary_mask, original_image, smooth_image, *,
                               roll_like_numpy):
    B, C, H, W = original_image.shape
    N = B * C
    HW = H * W

    # Flatten each image onto the lane axis (free reshape of contiguous data, no jnp.pad).
    mask2 = binary_mask.reshape(N, HW).astype(jnp.float32)
    orig2 = original_image.reshape(N, HW).astype(jnp.float32)
    smooth2 = smooth_image.reshape(N, HW).astype(jnp.float32)

    # Tile over the fused batch*channel axis; every block holds whole images so the 3x3
    # halo never crosses a block boundary.
    tn = min(N, max(1, (1 << 20) // (HW * 4)))   # ~1 MiB per input per pipeline buffer
    if tn < N:
        tn = max(8, (tn // 8) * 8)               # sub-full sublane blocks: multiple of 8
    # TODO(synk): extremely large images (8 * H * W * 4 bytes approaching VMEM) would also
    #             need tiling over H; not required for the image sizes this module targets.
    g = pl.cdiv(N, tn)

    kernel = functools.partial(
        _edge_loss_kernel,
        h=H, w=W, n_total=N, ragged=(N % tn != 0),
        roll_like_numpy=roll_like_numpy)

    img_spec = pl.BlockSpec((tn, HW), lambda i: (i, 0))
    out_spec = pl.BlockSpec((1, 1, 1), lambda i: (i, 0, 0))

    num_part, den_part = pl.pallas_call(
        kernel,
        out_shape=(jax.ShapeDtypeStruct((g, 1, 1), jnp.float32),
                   jax.ShapeDtypeStruct((g, 1, 1), jnp.float32)),
        grid=(g,),
        in_specs=[img_spec, img_spec, img_spec],
        out_specs=(out_spec, out_spec),
        compiler_params=pltpu.CompilerParams(
            dimension_semantics=("parallel",),        # independent blocks -> 2-TC shard
            vmem_limit_bytes=32 * 1024 * 1024),
    )(mask2, orig2, smooth2)

    # Same normalization as the torch module (no guard for an all-zero mask, by design).
    return jnp.sum(num_part) / jnp.sum(den_part)


def edge_preserving_loss(binary_mask, original_image, smooth_image):
    """loss = sum(where(mask>0, (E(orig)-E(smooth))^2, 0)) / sum(mask>0).  Inputs NCHW."""
    assert binary_mask.shape == original_image.shape == smooth_image.shape
    roll_like_numpy = _resolve_roll_convention()   # eager, outside the jit trace
    return _edge_preserving_loss_impl(binary_mask, original_image, smooth_image,
                                      roll_like_numpy=roll_like_numpy)


def _reference_loss(binary_mask, original_image, smooth_image):
    """Pure-JAX ground truth (explicit zero-padded 3x3 Sobel), independent of the kernel."""
    kx = jnp.array(_SOBEL_X, jnp.float32)
    ky = jnp.array(_SOBEL_Y, jnp.float32)

    def edge_response(x):
        B, C, H, W = x.shape
        xp = jnp.pad(x.astype(jnp.float32), ((0, 0), (0, 0), (1, 1), (1, 1)))
        gx = jnp.zeros(x.shape, jnp.float32)
        gy = jnp.zeros(x.shape, jnp.float32)
        for di in range(3):
            for dj in range(3):
                win = xp[:, :, di:di + H, dj:dj + W]
                gx = gx + kx[di, dj] * win
                gy = gy + ky[di, dj] * win
        return gx * gx + gy * gy

    m = binary_mask > 0
    diff = (edge_response(original_image) - edge_response(smooth_image)) ** 2
    return jnp.sum(jnp.where(m, diff, 0.0)) / jnp.sum(m.astype(jnp.float32))


if __name__ == "__main__":
    key = jax.random.PRNGKey(0)
    k1, k2, k3 = jax.random.split(key, 3)

    B, C, H, W = 2, 4, 16, 16
    original_image = jax.random.normal(k1, (B, C, H, W), jnp.float32)
    smooth_image = original_image + 0.1 * jax.random.normal(k2, (B, C, H, W), jnp.float32)
    binary_mask = jax.random.bernoulli(k3, 0.5, (B, C, H, W)).astype(jnp.float32)

    loss = jax.block_until_ready(
        edge_preserving_loss(binary_mask, original_image, smooth_image))
    ref = jax.block_until_ready(
        _reference_loss(binary_mask, original_image, smooth_image))
    assert jnp.allclose(loss, ref, rtol=1e-5, atol=1e-5), (loss, ref)

    print("KERNEL_OK")
</pallas_src>

<mosaic_0001>
module attributes {stable_mosaic.version = 11 : i64} {
  func.func @_roll_probe_kernel(%arg0: memref<8x128xf32, #tpu.memory_space<vmem>>, %arg1: memref<8x128xf32, #tpu.memory_space<vmem>>) attributes {dimension_semantics = [], scalar_prefetch = 0 : i64, scratch_operands = 0 : i64, tpu.core_type = #tpu.core_type<tc>} {
    %c0 = arith.constant 0 : index
    %c0_0 = arith.constant 0 : index
    %0 = vector.load %arg0[%c0, %c0_0] : memref<8x128xf32, #tpu.memory_space<vmem>>, vector<8x128xf32>
    %c1_i32 = arith.constant 1 : i32
    %1 = tpu.dynamic_rotate %0 by %c1_i32 dim 1 : vector<8x128xf32>, i32 -> vector<8x128xf32>
    %c0_1 = arith.constant 0 : index
    %c0_2 = arith.constant 0 : index
    %2 = vector.load %arg1[%c0_1, %c0_2] : memref<8x128xf32, #tpu.memory_space<vmem>>, vector<8x128xf32>
    tpu.vector_store %arg1[%c0_1, %c0_2], %1 {strides = array<i32>} : memref<8x128xf32, #tpu.memory_space<vmem>>, vector<8x128xf32>,
    return
  }
}

</mosaic_0001>

<llo_original>
// kernel: tpu_custom_call.1
$region0: #{tpu_custom_call.1}
  #allocation0 [shape = 'u32[]', space=smem, size = 0x4, offset = 0x4, fixed_abs, tag = 'smem constant byte address 0x4 - core index']
  #allocation1 [shape = 'u32[72,128]{1,0:T(1,128)}', space=vmem, size = 0x9000, scoped, tag = 'internal scratch']
  %s0 = inlined_call_operand.hbm [shape: f32[8,128], index: 0, kind: input, shape index: {}]
  %s1 = inlined_call_operand.hbm [shape: f32[8,128], index: 1, kind: output, shape index: {}]
  %s2 = sld [smem:[#allocation0]]
  $region18: #{tpu_custom_call.1} parent=0
    _
  %s4 = ssub.s32 1, %s2
  %s5 = scalar_select 0, %s4, %s2
  $region1: #{tpu_custom_call.1} parent=0
    #allocation2 [shape = 'u8[4096]{0}', space=vmem, size = 0x1000, scoped, tag = 'input window, operand 0, single buffered']
    #allocation3 [shape = 's32[1]{0}', space=sflag, size = 0x4, scoped, tag = 'scoped memory for tpu_custom_call.1']
    #allocation4 [shape = 's32[1]{0}', space=sflag, size = 0x4, scoped, tag = 'scoped memory for tpu_custom_call.1']
    #allocation5 [shape = 'u8[4096]{0}', space=vmem, size = 0x1000, scoped, tag = 'output window, operand 0, single buffered']
    %6 = vsyncpa [#allocation3], 0
    %7 = vsyncpa [#allocation4], 0
    // Predicated region
    $region2: #{tpu_custom_call.1} parent=1 // pred_check
      _
    $region3: #{tpu_custom_call.1} parent=1 // pred_check_branch
      %9 = sbr.rel (0) target = $region5
    $region4: #{tpu_custom_call.1} parent=1 // pred_region
      %11 = vsyncadd [#allocation3], 0
      %s13 = sshll.u32 %s0, 4
      %s14 = int_to_ptr.hbm [resolvable:$true] %s13
      %s15 = sshll.u32 [#allocation2], 4
      %s16 = int_to_ptr.vmem [resolvable:$true] %s15
      %18 = dma.hbm_to_vmem [thread:$0]  %s14, 128, %s16, [#allocation3]
    $region5: #{tpu_custom_call.1} parent=1 // pred_fallthru
      _
    // Predicated region
    $region6: #{tpu_custom_call.1} parent=1 // pred_check
      _
    $region7: #{tpu_custom_call.1} parent=1 // pred_check_branch
      %20 = sbr.rel (0) target = $region9
    $region8: #{tpu_custom_call.1} parent=1 // pred_region
      %22 = dma.done [#allocation3], 128
    $region9: #{tpu_custom_call.1} parent=1 // pred_fallthru
      _
    %v23 = vld [vmem:[#allocation2] sm:$0xff]
    %24 = vrot.lane.b32.xlu0 %v23, 1
    %v25 = vpop.permute.xlu0 %24
    %26 = vst [vmem:[#allocation5] sm:$0xff] %v25
    // Predicated region
    $region10: #{tpu_custom_call.1} parent=1 // pred_check
      _
    $region11: #{tpu_custom_call.1} parent=1 // pred_check_branch
      %28 = sbr.rel (0) target = $region13
    $region12: #{tpu_custom_call.1} parent=1 // pred_region
      %30 = vsyncadd [#allocation4], 0
      %s32 = sshll.u32 [#allocation5], 4
      %s33 = int_to_ptr.vmem [resolvable:$true] %s32
      %s34 = sshll.u32 %s1, 4
      %s35 = int_to_ptr.hbm [resolvable:$true] %s34
      %37 = dma.vmem_to_hbm [thread:$0]  %s33, 128, %s35, [#allocation4]
    $region13: #{tpu_custom_call.1} parent=1 // pred_fallthru
      _
    // Predicated region
    $region14: #{tpu_custom_call.1} parent=1 // pred_check
      _
    $region15: #{tpu_custom_call.1} parent=1 // pred_check_branch
      %39 = sbr.rel (0) target = $region17
    $region16: #{tpu_custom_call.1} parent=1 // pred_region
      %41 = dma.done [#allocation4], 128
    $region17: #{tpu_custom_call.1} parent=1 // pred_fallthru
      _
    %42 = vsyncpa [#allocation3], 1
    %43 = vsyncpa [#allocation4], 1

</llo_original>
